<compile_context>
chip_gen: v7x
topology: tpu7x:2x2x1
jax: 0.10.0
libtpu: 0.0.40
codegen_flags: <defaults>
</compile_context>

<pallas_src>
import functools

import jax
import jax.numpy as jnp
from jax.experimental import pallas as pl
from jax.experimental.pallas import tpu as pltpu

BN_EPS = 1e-5
_IN_FEAT = 3
_HID_FEAT = 4
_OUT_FEAT = 5
_DEFAULT_TILE = 32768           # 16K-64K lanes keeps the tiled path off per-step overhead
_MAX_SINGLE_PASS_COLS = 65536   # single-pass threshold: ~0.75+1+1.25 MiB + temps in VMEM


def _round_up(v, m):
    return ((v + m - 1) // m) * m


def _unpack_params(p):
    """p: (8,128) packed parameter tile."""
    w1 = p[0:_HID_FEAT, 0:_IN_FEAT]     # (4, 3)  linear1 weight (bias folded out)
    w2 = p[0:_OUT_FEAT, 8:12]           # (5, 4)  linear2 weight with gamma folded in
    b2 = p[0:_OUT_FEAT, 12:13]          # (5, 1)  linear2 bias with beta folded in
    return w1, w2, b2


def _single_pass_kernel(x_ref, p_ref, o_ref, *, inv_n):
    """Whole (padded) batch resident in VMEM: x read once, y written once."""
    w1, w2, b2 = _unpack_params(p_ref[...])
    h = jnp.dot(w1, x_ref[...], preferred_element_type=jnp.float32)      # (4, n_pad)
    # Zero-padded batch columns contribute 0 to the sums (no bias in h); divide by real N.
    mean = jnp.sum(h, axis=-1, keepdims=True) * inv_n                    # (4, 1)
    var = jnp.maximum(jnp.sum(h * h, axis=-1, keepdims=True) * inv_n - mean * mean, 0.0)
    hn = (h - mean) * jax.lax.rsqrt(var + BN_EPS)                        # EUP rsqrt
    y = jnp.dot(w2, hn, preferred_element_type=jnp.float32) + b2         # (5, n_pad)
    o_ref[...] = y.astype(o_ref.dtype)


def _two_phase_kernel(x_ref, p_ref, o_ref, sum_ref, sumsq_ref, *, inv_n):
    """Tiled path: phase 0 accumulates global BN stats, phase 1 normalizes + linear2."""
    phase = pl.program_id(0)   # 0: accumulate sum / sum^2, 1: normalize + store
    blk = pl.program_id(1)     # batch tile index

    w1, w2, b2 = _unpack_params(p_ref[...])
    h = jnp.dot(w1, x_ref[...], preferred_element_type=jnp.float32)      # (4, TILE)

    @pl.when(jnp.logical_and(phase == 0, blk == 0))
    def _():
        sum_ref[...] = jnp.zeros_like(sum_ref)
        sumsq_ref[...] = jnp.zeros_like(sumsq_ref)

    @pl.when(phase == 0)
    def _():
        sum_ref[...] += jnp.sum(h, axis=-1, keepdims=True)               # (4, 1)
        sumsq_ref[...] += jnp.sum(h * h, axis=-1, keepdims=True)         # (4, 1)
        # No output store in phase 0: the out block index is pinned to (0, 0) there,
        # so nothing is DMA'd to HBM until phase 1 produces real data.

    @pl.when(phase == 1)
    def _():
        mean = sum_ref[...] * inv_n
        var = jnp.maximum(sumsq_ref[...] * inv_n - mean * mean, 0.0)
        hn = (h - mean) * jax.lax.rsqrt(var + BN_EPS)
        y = jnp.dot(w2, hn, preferred_element_type=jnp.float32) + b2     # (5, TILE)
        o_ref[...] = y.astype(o_ref.dtype)


def _pack_params(params):
    """Exact host-side folding + packing into a single (8, 128) f32 tile."""
    w1 = params["w1"].astype(jnp.float32)                                 # (4, 3)
    w2f = params["w2"].astype(jnp.float32) * params["gamma"][None, :]     # (5, 4)
    b2f = params["b2"].astype(jnp.float32) + params["w2"] @ params["beta"]  # (5,)
    packed = jnp.zeros((8, 128), jnp.float32)
    packed = packed.at[0:_HID_FEAT, 0:_IN_FEAT].set(w1)
    packed = packed.at[0:_OUT_FEAT, 8:12].set(w2f)
    packed = packed.at[0:_OUT_FEAT, 12].set(b2f)
    return packed


def model_for_test_forward(x, params, *, tile=None, max_single_pass_cols=_MAX_SINGLE_PASS_COLS):
    """x: (N, 3) float32. params: dict from init_params. Returns (N, 5) float32."""
    n = x.shape[0]
    packed = _pack_params(params)
    inv_n = 1.0 / float(n)

    param_spec_1d = pl.BlockSpec((8, 128), lambda i: (0, 0))

    n_pad128 = _round_up(n, 128)
    if n_pad128 <= max_single_pass_cols:
        # ---- Single-pass path: whole batch in VMEM, x read once. ----
        n_pad = n_pad128
        x_fm = jnp.pad(x.T.astype(jnp.float32), ((0, 0), (0, n_pad - n)))   # (3, n_pad)
        kernel = functools.partial(_single_pass_kernel, inv_n=inv_n)
        out_fm = pl.pallas_call(
            kernel,
            out_shape=jax.ShapeDtypeStruct((_OUT_FEAT, n_pad), jnp.float32),
            grid_spec=pltpu.PrefetchScalarGridSpec(
                num_scalar_prefetch=0,
                grid=(1,),
                in_specs=[
                    pl.BlockSpec((_IN_FEAT, n_pad), lambda i: (0, 0)),
                    param_spec_1d,
                ],
                out_specs=pl.BlockSpec((_OUT_FEAT, n_pad), lambda i: (0, 0)),
            ),
            compiler_params=pltpu.CompilerParams(
                dimension_semantics=("arbitrary",),
            ),
        )(x_fm, packed)
        return out_fm[:, :n].T

    # ---- Tiled two-phase path for very large batches. ----
    if tile is None:
        tile = _DEFAULT_TILE
    tile = _round_up(min(tile, n_pad128), 128)
    nb = pl.cdiv(n, tile)
    n_pad = nb * tile

    x_fm = jnp.pad(x.T.astype(jnp.float32), ((0, 0), (0, n_pad - n)))       # (3, n_pad)
    kernel = functools.partial(_two_phase_kernel, inv_n=inv_n)

    out_fm = pl.pallas_call(
        kernel,
        out_shape=jax.ShapeDtypeStruct((_OUT_FEAT, n_pad), jnp.float32),
        grid_spec=pltpu.PrefetchScalarGridSpec(
            num_scalar_prefetch=0,
            grid=(2, nb),   # (phase, batch tile)
            in_specs=[
                pl.BlockSpec((_IN_FEAT, tile), lambda ph, j: (0, j)),
                pl.BlockSpec((8, 128), lambda ph, j: (0, 0)),
            ],
            # Phase 0 pins the out block to (0, 0): the buffer stays resident and no
            # placeholder data is written back; phase 1 walks the real blocks.
            out_specs=pl.BlockSpec((_OUT_FEAT, tile), lambda ph, j: (0, j * ph)),
            scratch_shapes=[
                pltpu.VMEM((_HID_FEAT, 1), jnp.float32),   # sum(h) per feature
                pltpu.VMEM((_HID_FEAT, 1), jnp.float32),   # sum(h^2) per feature
            ],
        ),
        compiler_params=pltpu.CompilerParams(
            # Both axes carry the BN-stats accumulator (phase 1 depends on every
            # phase-0 tile), so they must remain sequential.
            dimension_semantics=("arbitrary", "arbitrary"),
        ),
    )(x_fm, packed)

    return out_fm[:, :n].T   # back to the PyTorch (N, 5) layout


def init_params(key):
    """Deterministic parameter init mimicking the shapes in ModelForTest.__init__."""
    k1, k2, k3, k4 = jax.random.split(key, 4)
    return {
        # nn.Linear(3, 4): weight (4, 3), bias (4,)
        "w1": jax.random.normal(k1, (4, 3), jnp.float32) * 0.5,
        "b1": jax.random.normal(k2, (4,), jnp.float32) * 0.1,
        # nn.BatchNorm1d(4): weight (gamma), bias (beta) — perturbed from the 1/0 defaults
        # so the folding path is actually exercised.
        "gamma": jnp.ones((4,), jnp.float32) * 1.1,
        "beta": jnp.ones((4,), jnp.float32) * 0.05,
        # nn.Linear(4, 5): weight (5, 4), bias (5,)
        "w2": jax.random.normal(k3, (5, 4), jnp.float32) * 0.5,
        "b2": jax.random.normal(k4, (5,), jnp.float32) * 0.1,
    }


def _reference(x, params):
    """Pure-JAX reference of the same forward pass (training-mode BN, batch stats)."""
    h = x @ params["w1"].T + params["b1"]
    mean = jnp.mean(h, axis=0, keepdims=True)
    var = jnp.mean((h - mean) ** 2, axis=0, keepdims=True)
    h = (h - mean) / jnp.sqrt(var + BN_EPS) * params["gamma"] + params["beta"]
    return h @ params["w2"].T + params["b2"]


if __name__ == "__main__":
    key = jax.random.PRNGKey(0)
    k_x, k_x2, k_p = jax.random.split(key, 3)
    params = init_params(k_p)

    fwd = jax.jit(model_for_test_forward, static_argnames=("tile", "max_single_pass_cols"))

    # Small shape consistent with the module (batch=8, in_features=3): single-pass path.
    x = jax.random.normal(k_x, (8, 3), jnp.float32)
    out = jax.block_until_ready(fwd(x, params))
    ref = _reference(x, params)
    assert out.shape == (8, 5), out.shape
    assert jnp.allclose(out, ref, atol=1e-4, rtol=1e-4)

    # Non-multiple-of-tile batch, tiled two-phase path forced (multi-block grid, global
    # stats accumulation, resident-output phase-0).
    x2 = jax.random.normal(k_x2, (777, 3), jnp.float32)
    out2 = jax.block_until_ready(fwd(x2, params, tile=256, max_single_pass_cols=0))
    ref2 = _reference(x2, params)
    assert out2.shape == (777, 5), out2.shape
    assert jnp.allclose(out2, ref2, atol=1e-4, rtol=1e-4)

    print("KERNEL_OK")
</pallas_src>

<mosaic_0001>
module attributes {stable_mosaic.version = 11 : i64} {
  func.func @_single_pass_kernel(%arg0: i32, %arg1: memref<3x128xf32, #tpu.memory_space<vmem>>, %arg2: memref<8x128xf32, #tpu.memory_space<vmem>>, %arg3: memref<5x128xf32, #tpu.memory_space<vmem>>) attributes {dimension_semantics = [#tpu.dimension_semantics<arbitrary>], iteration_bounds = array<i64: 1>, scalar_prefetch = 0 : i64, scratch_operands = 0 : i64, tpu.core_type = #tpu.core_type<tc>, window_params = [{pipeline_mode = #tpu.pipeline_mode<synchronous>, transform_indices = @transform_0, window_bounds = array<i64: 3, 128>}, {pipeline_mode = #tpu.pipeline_mode<synchronous>, transform_indices = @transform_1, window_bounds = array<i64: 8, 128>}, {pipeline_mode = #tpu.pipeline_mode<synchronous>, transform_indices = @transform_2, window_bounds = array<i64: 5, 128>}]} {
    %c0 = arith.constant 0 : index
    %c0_0 = arith.constant 0 : index
    %0 = vector.load %arg2[%c0, %c0_0] : memref<8x128xf32, #tpu.memory_space<vmem>>, vector<8x128xf32>
    %1 = vector.extract_strided_slice %0 {offsets = [0, 0], sizes = [4, 3], strides = [1, 1]} : vector<8x128xf32> to vector<4x3xf32>
    %2 = vector.extract_strided_slice %0 {offsets = [0, 8], sizes = [5, 4], strides = [1, 1]} : vector<8x128xf32> to vector<5x4xf32>
    %3 = vector.extract_strided_slice %0 {offsets = [0, 12], sizes = [5, 1], strides = [1, 1]} : vector<8x128xf32> to vector<5x1xf32>
    %c0_1 = arith.constant 0 : index
    %c0_2 = arith.constant 0 : index
    %4 = vector.load %arg1[%c0_1, %c0_2] : memref<3x128xf32, #tpu.memory_space<vmem>>, vector<3x128xf32>
    %cst = arith.constant dense<0.000000e+00> : vector<4x128xf32>
    %5 = tpu.matmul %1, %4, %cst {dimension_numbers = #tpu.dot_dimension_numbers<[1], [0], [0], [1], [0, 0, 1, 1], [], []>} : vector<4x3xf32>, vector<3x128xf32>, vector<4x128xf32> -> vector<4x128xf32>
    %cst_3 = arith.constant dense<0.000000e+00> : vector<4xf32>
    %6 = vector.multi_reduction <add>, %5, %cst_3 [1] : vector<4x128xf32> to vector<4xf32>
    %7 = vector.shape_cast %6 : vector<4xf32> to vector<4x1xf32>
    %cst_4 = arith.constant 1.250000e-01 : f32
    %8 = vector.broadcast %cst_4 : f32 to vector<4x1xf32>
    %9 = arith.mulf %7, %8 : vector<4x1xf32>
    %10 = arith.mulf %5, %5 : vector<4x128xf32>
    %cst_5 = arith.constant dense<0.000000e+00> : vector<4xf32>
    %11 = vector.multi_reduction <add>, %10, %cst_5 [1] : vector<4x128xf32> to vector<4xf32>
    %12 = vector.shape_cast %11 : vector<4xf32> to vector<4x1xf32>
    %cst_6 = arith.constant 1.250000e-01 : f32
    %13 = vector.broadcast %cst_6 : f32 to vector<4x1xf32>
    %14 = arith.mulf %12, %13 : vector<4x1xf32>
    %15 = arith.mulf %9, %9 : vector<4x1xf32>
    %16 = arith.subf %14, %15 : vector<4x1xf32>
    %cst_7 = arith.constant 0.000000e+00 : f32
    %17 = vector.broadcast %cst_7 : f32 to vector<4x1xf32>
    %18 = arith.maximumf %16, %17 : vector<4x1xf32>
    %19 = vector.broadcast %9 : vector<4x1xf32> to vector<4x128xf32>
    %20 = arith.subf %5, %19 : vector<4x128xf32>
    %cst_8 = arith.constant 9.99999974E-6 : f32
    %21 = vector.broadcast %cst_8 : f32 to vector<4x1xf32>
    %22 = arith.addf %18, %21 : vector<4x1xf32>
    %23 = math.rsqrt %22 : vector<4x1xf32>
    %24 = vector.broadcast %23 : vector<4x1xf32> to vector<4x128xf32>
    %25 = arith.mulf %20, %24 : vector<4x128xf32>
    %cst_9 = arith.constant dense<0.000000e+00> : vector<5x128xf32>
    %26 = tpu.matmul %2, %25, %cst_9 {dimension_numbers = #tpu.dot_dimension_numbers<[1], [0], [0], [1], [0, 0, 1, 1], [], []>} : vector<5x4xf32>, vector<4x128xf32>, vector<5x128xf32> -> vector<5x128xf32>
    %27 = vector.broadcast %3 : vector<5x1xf32> to vector<5x128xf32>
    %28 = arith.addf %26, %27 : vector<5x128xf32>
    %c0_10 = arith.constant 0 : index
    %c0_11 = arith.constant 0 : index
    %29 = vector.load %arg3[%c0_10, %c0_11] : memref<5x128xf32, #tpu.memory_space<vmem>>, vector<5x128xf32>
    tpu.vector_store %arg3[%c0_10, %c0_11], %28 {strides = array<i32>} : memref<5x128xf32, #tpu.memory_space<vmem>>, vector<5x128xf32>,
    return
  }
  func.func @transform_0(%arg0: i32) -> (i32, i32) {
    %c0_i32 = arith.constant 0 : i32
    %c0_i32_0 = arith.constant 0 : i32
    %c0_i32_1 = arith.constant 0 : i32
    return %c0_i32, %c0_i32_0 : i32, i32
  }
  func.func @transform_1(%arg0: i32) -> (i32, i32) {
    %c0_i32 = arith.constant 0 : i32
    %c0_i32_0 = arith.constant 0 : i32
    %c0_i32_1 = arith.constant 0 : i32
    return %c0_i32, %c0_i32_0 : i32, i32
  }
  func.func @transform_2(%arg0: i32) -> (i32, i32) {
    %c0_i32 = arith.constant 0 : i32
    %c0_i32_0 = arith.constant 0 : i32
    %c0_i32_1 = arith.constant 0 : i32
    return %c0_i32, %c0_i32_0 : i32, i32
  }
}

</mosaic_0001>

<llo_original>
// kernel: model_for_test_forward.1
$region0: #{model_for_test_forward.1}
  #allocation0 [shape = 'u32[]', space=smem, size = 0x4, offset = 0x4, fixed_abs, tag = 'smem constant byte address 0x4 - core index']
  #allocation1 [shape = 'u32[144,128]{1,0:T(1,128)}', space=vmem, size = 0x12000, scoped, tag = 'internal scratch']
  %s0 = inlined_call_operand.vmem [shape: f32[3,128], index: 0, kind: input, shape index: {}]
  %s1 = inlined_call_operand.vmem [shape: f32[8,128], index: 1, kind: input, shape index: {}]
  %s2 = inlined_call_operand.vmem [shape: f32[5,128], index: 2, kind: output, shape index: {}]
  %s3 = sld [smem:[#allocation0]]
  $region18: #{model_for_test_forward.1} parent=0
    _
  %s5 = ssub.s32 1, %s3
  %s6 = scalar_select 0, %s5, %s3
  // Predicated region
  $region2: #{model_for_test_forward.1} parent=0 // pred_check
    _
  $region3: #{model_for_test_forward.1} parent=0 // pred_check_branch
    %8 = sbr.rel (0) target = $region5
  $region4: #{model_for_test_forward.1} parent=0 // pred_region
    _
  $region5: #{model_for_test_forward.1} parent=0 // pred_fallthru
    _
  // Predicated region
  $region6: #{model_for_test_forward.1} parent=0 // pred_check
    _
  $region7: #{model_for_test_forward.1} parent=0 // pred_check_branch
    %10 = sbr.rel (0) target = $region9
  $region8: #{model_for_test_forward.1} parent=0 // pred_region
    _
  $region9: #{model_for_test_forward.1} parent=0 // pred_fallthru
    _
  %v11 = vld [vmem:[%s1] sm:$0xff]
  %v12 = vld [vmem:[%s0] sm:$0x7]
  %vm13 = vcmask 23552
  %v15 = vsel %vm13, %v11, 0
  %vm17 = vcmask 1042432
  %v19 = vsel %vm17, %v12, 0
  %21 = vmatprep.subr.mxu0 0.0
  %22 = vmatpush1.msra.mxu0 %v19
  %23 = vmatprep.subr.mxu0 0.0
  %24 = vmatpush1.msra.mxu0 0.0
  %25 = vmatprep.subr.mxu0 0.0
  %26 = vmatpush1.msra.mxu0 0.0
  %27 = vmatprep.subr.mxu0 0.0
  %28 = vmatpush1.msra.mxu0 0.0
  %29 = vmatprep.subr.mxu0 0.0
  %30 = vmatpush1.msra.mxu0 0.0
  %31 = vmatprep.subr.mxu0 0.0
  %32 = vmatpush1.msra.mxu0 0.0
  %33 = vmatprep.subr.mxu0 0.0
  %34 = vmatpush1.msra.mxu0 0.0
  %35 = vmatprep.subr.mxu0 0.0
  %36 = vmatpush1.msra.mxu0 0.0
  %37 = vmatprep.subr.mxu0 0.0
  %38 = vmatpush1.msra.mxu0 0.0
  %39 = vmatprep.subr.mxu0 0.0
  %40 = vmatpush1.msra.mxu0 0.0
  %41 = vmatprep.subr.mxu0 0.0
  %42 = vmatpush1.msra.mxu0 0.0
  %43 = vmatprep.subr.mxu0 0.0
  %44 = vmatpush1.msra.mxu0 0.0
  %45 = vmatprep.subr.mxu0 0.0
  %46 = vmatpush1.msra.mxu0 0.0
  %47 = vmatprep.subr.mxu0 0.0
  %48 = vmatpush1.msra.mxu0 0.0
  %49 = vmatprep.subr.mxu0 0.0
  %50 = vmatpush1.msra.mxu0 0.0
  %51 = vmatprep.subr.mxu0 0.0
  %52 = vmatpush1.msra.mxu0 0.0
  %53 = vmatprep.subr.mxu0 0.0
  %54 = vmatpush1.msra.mxu0 0.0
  %55 = vmatprep.subr.mxu0 0.0
  %56 = vmatpush1.msra.mxu0 0.0
  %57 = vmatprep.subr.mxu0 0.0
  %58 = vmatpush1.msra.mxu0 0.0
  %59 = vmatprep.subr.mxu0 0.0
  %60 = vmatpush1.msra.mxu0 0.0
  %61 = vmatprep.subr.mxu0 0.0
  %62 = vmatpush1.msra.mxu0 0.0
  %63 = vmatprep.subr.mxu0 0.0
  %64 = vmatpush1.msra.mxu0 0.0
  %65 = vmatprep.subr.mxu0 0.0
  %66 = vmatpush1.msra.mxu0 0.0
  %67 = vmatprep.subr.mxu0 0.0
  %68 = vmatpush1.msra.mxu0 0.0
  %69 = vmatprep.subr.mxu0 0.0
  %70 = vmatpush1.msra.mxu0 0.0
  %71 = vmatprep.subr.mxu0 0.0
  %72 = vmatpush1.msra.mxu0 0.0
  %73 = vmatprep.subr.mxu0 0.0
  %74 = vmatpush1.msra.mxu0 0.0
  %75 = vmatprep.subr.mxu0 0.0
  %76 = vmatpush1.msra.mxu0 0.0
  %77 = vmatprep.subr.mxu0 0.0
  %78 = vmatpush1.msra.mxu0 0.0
  %79 = vmatprep.subr.mxu0 0.0
  %80 = vmatpush1.msra.mxu0 0.0
  %81 = vmatprep.subr.mxu0 0.0
  %82 = vmatpush1.msra.mxu0 0.0
  %83 = vmatprep.subr.mxu0 0.0
  %84 = vmatpush1.msra.mxu0 0.0
  %85 = vmatprep.mubr.f32.mxu0 0.0
  %86 = vmatmul.mubr.f32.gmra.mrb[0].mxu0 %v15
  %v87 = vpop.f32.mrb[0].mxu0
  %v88 = vadd.f32 0.0, %v87
  %v89 = vpop.f32.mrb[0].mxu0
  %90 = vdwg.mxu0
  %vm91 = vcmask 1043456
  %v92 = vsel %vm91, %v88, 0.0
  %93 = vadd.xlane.f32.xlu0 %v92
  %v94 = vpop.xlane.xlu0 %93
  %v95 = vmul.f32 %v94, 0.125
  %v96 = vmul.f32 %v88, %v88
  %v97 = vsel %vm91, %v96, 0.0
  %98 = vadd.xlane.f32.xlu0 %v97
  %v99 = vpop.xlane.xlu0 %98
  %v100 = vmul.f32 %v99, 0.125
  %v101 = vmul.f32 %v95, %v95
  %v102 = vsub.f32 %v100, %v101
  %v103 = vmax.f32 %v102, 0.0
  %v104 = vsub.f32 %v88, %v95
  %v105 = vadd.f32 %v103, 1e-05
  %v106 = vrsqrt.pop %v105
  %v107 = vmul.f32 %v104, %v106
  %108 = vset.pattern.permute.xlu0 12
  %109 = vperm.xlu0 %108, %v11
  %v110 = vpop.permute.xlu0 %109
  %112 = vrot.lane.b32.xlu0 %v11, 120
  %v113 = vpop.permute.xlu0 %112
  %vm114 = vcmask 31744
  %v115 = vsel %vm114, %v113, 0
  %v118 = vsel %vm91, %v107, 0
  %120 = vmatprep.subr.mxu0 0.0
  %121 = vmatpush1.msra.mxu0 %v118
  %122 = vmatprep.subr.mxu0 0.0
  %123 = vmatpush1.msra.mxu0 0.0
  %124 = vmatprep.subr.mxu0 0.0
  %125 = vmatpush1.msra.mxu0 0.0
  %126 = vmatprep.subr.mxu0 0.0
  %127 = vmatpush1.msra.mxu0 0.0
  %128 = vmatprep.subr.mxu0 0.0
  %129 = vmatpush1.msra.mxu0 0.0
  %130 = vmatprep.subr.mxu0 0.0
  %131 = vmatpush1.msra.mxu0 0.0
  %132 = vmatprep.subr.mxu0 0.0
  %133 = vmatpush1.msra.mxu0 0.0
  %134 = vmatprep.subr.mxu0 0.0
  %135 = vmatpush1.msra.mxu0 0.0
  %136 = vmatprep.subr.mxu0 0.0
  %137 = vmatpush1.msra.mxu0 0.0
  %138 = vmatprep.subr.mxu0 0.0
  %139 = vmatpush1.msra.mxu0 0.0
  %140 = vmatprep.subr.mxu0 0.0
  %141 = vmatpush1.msra.mxu0 0.0
  %142 = vmatprep.subr.mxu0 0.0
  %143 = vmatpush1.msra.mxu0 0.0
  %144 = vmatprep.subr.mxu0 0.0
  %145 = vmatpush1.msra.mxu0 0.0
  %146 = vmatprep.subr.mxu0 0.0
  %147 = vmatpush1.msra.mxu0 0.0
  %148 = vmatprep.subr.mxu0 0.0
  %149 = vmatpush1.msra.mxu0 0.0
  %150 = vmatprep.subr.mxu0 0.0
  %151 = vmatpush1.msra.mxu0 0.0
  %152 = vmatprep.subr.mxu0 0.0
  %153 = vmatpush1.msra.mxu0 0.0
  %154 = vmatprep.subr.mxu0 0.0
  %155 = vmatpush1.msra.mxu0 0.0
  %156 = vmatprep.subr.mxu0 0.0
  %157 = vmatpush1.msra.mxu0 0.0
  %158 = vmatprep.subr.mxu0 0.0
  %159 = vmatpush1.msra.mxu0 0.0
  %160 = vmatprep.subr.mxu0 0.0
  %161 = vmatpush1.msra.mxu0 0.0
  %162 = vmatprep.subr.mxu0 0.0
  %163 = vmatpush1.msra.mxu0 0.0
  %164 = vmatprep.subr.mxu0 0.0
  %165 = vmatpush1.msra.mxu0 0.0
  %166 = vmatprep.subr.mxu0 0.0
  %167 = vmatpush1.msra.mxu0 0.0
  %168 = vmatprep.subr.mxu0 0.0
  %169 = vmatpush1.msra.mxu0 0.0
  %170 = vmatprep.subr.mxu0 0.0
  %171 = vmatpush1.msra.mxu0 0.0
  %172 = vmatprep.subr.mxu0 0.0
  %173 = vmatpush1.msra.mxu0 0.0
  %174 = vmatprep.subr.mxu0 0.0
  %175 = vmatpush1.msra.mxu0 0.0
  %176 = vmatprep.subr.mxu0 0.0
  %177 = vmatpush1.msra.mxu0 0.0
  %178 = vmatprep.subr.mxu0 0.0
  %179 = vmatpush1.msra.mxu0 0.0
  %180 = vmatprep.subr.mxu0 0.0
  %181 = vmatpush1.msra.mxu0 0.0
  %182 = vmatprep.subr.mxu0 0.0
  %183 = vmatpush1.msra.mxu0 0.0
  %184 = vmatprep.mubr.f32.mxu0 0.0
  %185 = vmatmul.mubr.f32.gmra.mrb[0].mxu0 %v115
  %v186 = vpop.f32.mrb[0].mxu0
  %v187 = vadd.f32 %v110, %v186
  %v188 = vpop.f32.mrb[0].mxu0
  %189 = vdwg.mxu0
  %190 = vst [vmem:[%s2] sm:$0x1f] %v187
  // Predicated region
  $region10: #{model_for_test_forward.1} parent=0 // pred_check
    _
  $region11: #{model_for_test_forward.1} parent=0 // pred_check_branch
    %192 = sbr.rel (0) target = $region13
  $region12: #{model_for_test_forward.1} parent=0 // pred_region
    _
  $region13: #{model_for_test_forward.1} parent=0 // pred_fallthru
    _
  // Predicated region
  $region14: #{model_for_test_forward.1} parent=0 // pred_check
    _
  $region15: #{model_for_test_forward.1} parent=0 // pred_check_branch
    %194 = sbr.rel (0) target = $region17
  $region16: #{model_for_test_forward.1} parent=0 // pred_region
    _
  $region17: #{model_for_test_forward.1} parent=0 // pred_fallthru
    _

</llo_original>
